<compile_context>
chip_gen: v6e
topology: v6e:2x2x1
jax: 0.10.0
libtpu: 0.0.40
codegen_flags: <defaults>
</compile_context>

<pallas_src>
import jax
import jax.numpy as jnp
from jax.experimental import pallas as pl
from jax.experimental.pallas import tpu as pltpu


def _hbm_copy_kernel(xs_ref, out_ref, sem):
    """Whole-array HBM->HBM DMA copy (no VMEM staging, no vector slots)."""
    cp = pltpu.make_async_copy(xs_ref, out_ref, sem)
    cp.start()
    cp.wait()


def _copy_hbm(x):
    """Physical copy of `x` via a single HBM->HBM async DMA Pallas kernel."""
    return pl.pallas_call(
        _hbm_copy_kernel,
        out_shape=jax.ShapeDtypeStruct(x.shape, x.dtype),
        in_specs=[pl.BlockSpec(memory_space=pl.ANY)],   # stay in HBM
        out_specs=pl.BlockSpec(memory_space=pl.ANY),    # stay in HBM
        scratch_shapes=[pltpu.SemaphoreType.DMA],       # one DMA semaphore
    )(x)


def init_controller(xs, read_size, *, physical_copy=False):
    """JAX equivalent of AbstractController.init_controller(batch_size, xs).

    Returns (read, input_buffer, output_buffer).

    Default (physical_copy=False): the input buffer *is* xs (zero-cost; the
    right lowering when xs is donated / not mutated elsewhere).  Set
    physical_copy=True only when a distinct physical HBM buffer is genuinely
    required; that path runs the single-DMA Pallas copy kernel.
    """
    batch_size, t, r = xs.shape
    assert r == read_size, "xs last dim must equal read_size"

    # _init_struct: read vector is all zeros -> XLA constant broadcast
    # (fused / elided by XLA; no kernel launch, no HBM zero-fill kernel).
    read = jnp.zeros((batch_size, read_size), dtype=xs.dtype)

    # _init_buffer: output buffer is documented "empty"; zeros is the stricter
    # safe contract, also emitted as an XLA constant broadcast.
    output_buffer = jnp.zeros((batch_size, t, read_size), dtype=xs.dtype)

    # _init_buffer: input buffer <- xs.
    if physical_copy:
        input_buffer = _copy_hbm(xs)     # one HBM->HBM DMA, full array
    else:
        input_buffer = xs                # identity: no data movement at all

    return read, input_buffer, output_buffer


if __name__ == "__main__":
    # Controller config (constructor args): read_size, struct_type.
    # struct_type has no tensor content; read_size picks the vector width.
    read_size = 32
    batch_size = 2
    t = 8

    key = jax.random.PRNGKey(0)
    xs = jax.random.normal(key, (batch_size, t, read_size), dtype=jnp.float32)

    # Exercise the Pallas DMA-copy path once (physical_copy=True) so the
    # kernel itself is compiled and run; the production default is the
    # zero-cost identity path.
    init_fn = jax.jit(
        lambda x: init_controller(x, read_size, physical_copy=True))
    read, in_buf, out_buf = init_fn(xs)
    jax.block_until_ready((read, in_buf, out_buf))

    # Correctness checks against the PyTorch semantics.
    assert read.shape == (batch_size, read_size)
    assert bool(jnp.all(read == 0.0))
    assert in_buf.shape == (batch_size, t, read_size)
    assert bool(jnp.allclose(in_buf, xs))
    assert out_buf.shape == (batch_size, t, read_size)
    assert bool(jnp.all(out_buf == 0.0))

    # Also sanity-check the default (identity) path.
    read2, in_buf2, out_buf2 = jax.jit(
        lambda x: init_controller(x, read_size))(xs)
    jax.block_until_ready((read2, in_buf2, out_buf2))
    assert bool(jnp.allclose(in_buf2, xs))
    assert bool(jnp.all(read2 == 0.0)) and bool(jnp.all(out_buf2 == 0.0))

    print("KERNEL_OK")
</pallas_src>

<mosaic_0001>
module attributes {stable_mosaic.version = 11 : i64} {
  func.func @_hbm_copy_kernel(%arg0: memref<2x8x32xf32, #tpu.memory_space<any>>, %arg1: memref<2x8x32xf32, #tpu.memory_space<any>>, %arg2: memref<!tpu.dma_semaphore, #tpu.memory_space<semaphore_mem>>) attributes {dimension_semantics = [], scalar_prefetch = 0 : i64, scratch_operands = 1 : i64, tpu.core_type = #tpu.core_type<tc>} {
    tpu.enqueue_dma source(%arg0 : memref<2x8x32xf32, #tpu.memory_space<any>>) target(%arg1 : memref<2x8x32xf32, #tpu.memory_space<any>>) target_semaphore(%arg2 : memref<!tpu.dma_semaphore, #tpu.memory_space<semaphore_mem>>)
    tpu.wait_dma2 semaphore(%arg2 : memref<!tpu.dma_semaphore, #tpu.memory_space<semaphore_mem>>) src(%arg0 : memref<2x8x32xf32, #tpu.memory_space<any>>) dst(%arg1 : memref<2x8x32xf32, #tpu.memory_space<any>>)
    return
  }
}

</mosaic_0001>

<llo_original>
// kernel: _lambda_.1
$region0: #{_lambda_.1}
  #allocation0 [shape = 'u32[]', space=smem, size = 0x4, offset = 0x4, fixed_abs, tag = 'smem constant byte address 0x4 - core index']
  #allocation1 [shape = 'u32[144,128]{1,0:T(1,128)}', space=vmem, size = 0x12000, scoped, tag = 'internal scratch']
  #allocation2 [shape = 's32[1]{0}', space=sflag, size = 0x4, scoped, tag = 'scratch operand']
  #allocation3 [shape = 's32[]', space=sflag, size = 0x4, offset = 0, fixed_abs, tag = 'sflag constant byte address 0x0 - dummy sync flag']
  #allocation4 [shape = 'u32[0]{0}', space=smem, size = 0, offset = 0, fixed_abs, tag = 'smem constant byte address 0x0 - null']
  %s0 = inlined_call_operand.hbm [shape: f32[2,8,32], index: 0, kind: input, shape index: {}]
  %s1 = inlined_call_operand.hbm [shape: f32[2,8,32], index: 1, kind: output, shape index: {}]
  %s2 = sld [smem:[#allocation0]]
  $region2: #{_lambda_.1} parent=0
    _
  %s4 = ssub.s32 1, %s2
  %s5 = scalar_select 0, %s4, %s2
  %s7 = sshll.u32 1, 14
  %s8 = sxor.u32 4294967295, %s7
  %12 = dma.general %s0, 256, %s1, [#allocation2], 131072, [#allocation4], 0, 0
  %s13 = smul.u32 2, 8
  %s14 = smul.u32 %s13, 1
  %s15 = sshll.u32 %s14, 4
  %16 = dma.done [#allocation2], %s15
  %17 = vsyncmov [#allocation2]
  %s18 = vpop.sfrf %17
  %p19 = scmp.eq.s32.totalorder %s18, 0
  %p20 = pneg %p19
  %22 = shalt.err (%p20)

</llo_original>
